<compile_context>
chip_gen: v6e
topology: v6e:2x2x1
jax: 0.10.0
libtpu: 0.0.40
codegen_flags: <defaults>
</compile_context>

<pallas_src>
import functools

import jax
import jax.numpy as jnp
from jax.experimental import pallas as pl
from jax.experimental.pallas import tpu as pltpu

LANE = 128               # lane width of a vreg (last dim)
SUBLANE = 8              # f32 sublane count (second-to-last dim)
DEFAULT_TILE_B_CAP = 1024  # safe for v7x (64 MiB VMEM / 32 MiB scoped default)


def _round_up(n, m):
    return ((n + m - 1) // m) * m


# ----------------------------------------------------------------------------
# Fused kernel: chains every Linear (+ optional ReLU) layer for one batch tile.
# refs = (x_ref, w0, b0, w1, b1, ..., wN, bN, o_ref); all live fully in VMEM.
# Matmuls run on the MXU with f32 accumulation; bias-add + ReLU on the VPU.
# ----------------------------------------------------------------------------
def _fnn_kernel(*refs, relu_flags):
    x_ref = refs[0]
    o_ref = refs[-1]
    wb_refs = refs[1:-1]

    h = x_ref[...]
    for i, relu in enumerate(relu_flags):
        w = wb_refs[2 * i][...]
        b = wb_refs[2 * i + 1][...]          # (1, Dout) -> broadcasts over batch
        h = jnp.dot(h, w, preferred_element_type=jnp.float32) + b
        if relu:
            h = jnp.maximum(h, 0.0)
    o_ref[...] = h.astype(o_ref.dtype)


# ----------------------------------------------------------------------------
# Parameter construction: reproduces the PyTorch module's layer loop.
#   while input_shape >= dec_speed**2 * output_shape:
#       Linear(input_shape, input_shape // dec_speed) [+ ReLU]
#       input_shape //= dec_speed
#   Linear(input_shape, output_shape)
# (use_bnorm=False, dropout=0.0 for this instantiation)
# ----------------------------------------------------------------------------
def make_fnn_params(key, input_shape, output_shape, dec_speed, use_relu=True,
                    dtype=jnp.float32):
    dims = []
    t = dec_speed
    d = input_shape
    while d >= t * t * output_shape:
        dims.append((d, d // t, use_relu))   # hidden layer
        d //= t
    dims.append((d, output_shape, False))    # final layer, never ReLU

    params = []
    for (din, dout, relu) in dims:
        key, kw, kb = jax.random.split(key, 3)
        # PyTorch nn.Linear default init: U(-1/sqrt(fan_in), 1/sqrt(fan_in))
        bound = 1.0 / jnp.sqrt(jnp.asarray(din, dtype))
        w = jax.random.uniform(kw, (din, dout), dtype, -bound, bound)
        b = jax.random.uniform(kb, (1, dout), dtype, -bound, bound)
        params.append((w, b, relu))
    return params


# ----------------------------------------------------------------------------
# One-time preparation: pad every layer to lane-dense widths.  Zero-padded W
# rows/cols + zero bias padding keep the real columns numerically identical.
# Done ONCE, outside the per-call hot path.
# ----------------------------------------------------------------------------
def prepare_fnn_params(params, dtype=jnp.float32):
    padded_wb = []
    relu_flags = []
    din_real = params[0][0].shape[0]
    din_p = _round_up(din_real, LANE)
    prev, prev_p = din_real, din_p
    for (w, b, relu) in params:
        din, dout = w.shape
        assert din == prev, "layer input width mismatch"
        dout_p = _round_up(dout, LANE)
        w_p = jnp.zeros((prev_p, dout_p), dtype).at[:din, :dout].set(w.astype(dtype))
        b_p = jnp.zeros((1, dout_p), dtype).at[:, :dout].set(b.astype(dtype))
        padded_wb.extend([w_p, b_p])
        relu_flags.append(bool(relu))
        prev, prev_p = dout, dout_p
    return {
        "padded_wb": tuple(padded_wb),
        "relu_flags": tuple(relu_flags),
        "din": din_real, "din_p": din_p,
        "dout": prev, "dout_p": prev_p,
    }


# ----------------------------------------------------------------------------
# Jitted forward: pad x, run the batch-tiled fused kernel, slice the result.
# ----------------------------------------------------------------------------
@functools.partial(
    jax.jit,
    static_argnames=("relu_flags", "din", "din_p", "dout", "dout_p", "tile_b"))
def _fnn_forward_impl(x, padded_wb, *, relu_flags, din, din_p, dout, dout_p,
                      tile_b):
    B = x.shape[0]
    dtype = x.dtype
    itemsize = jnp.dtype(dtype).itemsize

    Bp = _round_up(max(B, tile_b), tile_b)
    grid = (Bp // tile_b,)

    # Pad activations: extra rows/cols are zero (sliced off at the end).
    x_p = jnp.zeros((Bp, din_p), dtype).at[:B, :din].set(x)

    # x / out tiles walk the batch; weights use a constant index_map so they
    # stay resident in VMEM across grid steps (no re-DMA).
    in_specs = [pl.BlockSpec((tile_b, din_p), lambda i: (i, 0))]
    for arr in padded_wb:
        in_specs.append(pl.BlockSpec(arr.shape, lambda i: (0, 0)))
    out_specs = pl.BlockSpec((tile_b, dout_p), lambda i: (i, 0))

    flops = 0
    bytes_accessed = (Bp * din_p + Bp * dout_p) * itemsize
    for k in range(0, len(padded_wb), 2):
        w_p, b_p = padded_wb[k], padded_wb[k + 1]
        flops += 2 * Bp * w_p.shape[0] * w_p.shape[1]
        bytes_accessed += (w_p.size + b_p.size) * itemsize

    kernel = functools.partial(_fnn_kernel, relu_flags=relu_flags)
    out_p = pl.pallas_call(
        kernel,
        out_shape=jax.ShapeDtypeStruct((Bp, dout_p), dtype),
        grid=grid,
        in_specs=in_specs,
        out_specs=out_specs,
        compiler_params=pltpu.CompilerParams(
            dimension_semantics=("parallel",)),
        cost_estimate=pl.CostEstimate(
            flops=flops, transcendentals=0, bytes_accessed=bytes_accessed),
    )(x_p, *padded_wb)

    return out_p[:B, :dout]


def fnn_forward(x, prepared, tile_b=None):
    if tile_b is None:
        tile_b = min(_round_up(max(x.shape[0], SUBLANE), SUBLANE),
                     DEFAULT_TILE_B_CAP)
    tile_b = int(_round_up(tile_b, SUBLANE))
    return _fnn_forward_impl(
        x, prepared["padded_wb"],
        relu_flags=prepared["relu_flags"],
        din=prepared["din"], din_p=prepared["din_p"],
        dout=prepared["dout"], dout_p=prepared["dout_p"],
        tile_b=tile_b)


# Pure-JAX reference (mirrors the PyTorch forward).
def fnn_reference(x, params):
    out = x
    for (w, b, relu) in params:
        out = out @ w + b
        if relu:
            out = jnp.maximum(out, 0.0)
    return out


if __name__ == "__main__":
    # FNN(input_shape=256, output_shape=8, dec_speed=2, use_relu=True,
    #     use_bnorm=False, dropout=0.0)
    input_shape, output_shape, dec_speed = 256, 8, 2

    key = jax.random.PRNGKey(0)
    kx, kp, kx2 = jax.random.split(key, 3)
    params = make_fnn_params(kp, input_shape, output_shape, dec_speed,
                             use_relu=True)
    prepared = prepare_fnn_params(params)        # padded once, reused per call

    # Small batch (sub-tile) — matches the module's typical use.
    x = jax.random.normal(kx, (4, input_shape), jnp.float32)
    y = jax.block_until_ready(fnn_forward(x, prepared))
    y_ref = fnn_reference(x, params)
    assert y.shape == (4, output_shape)
    assert jnp.allclose(y, y_ref, atol=1e-4, rtol=1e-4)

    # Larger batch: exercises the batch-tiled 'parallel' grid (2 tiles of 128).
    x2 = jax.random.normal(kx2, (200, input_shape), jnp.float32)
    y2 = jax.block_until_ready(fnn_forward(x2, prepared, tile_b=128))
    y2_ref = fnn_reference(x2, params)
    assert y2.shape == (200, output_shape)
    assert jnp.allclose(y2, y2_ref, atol=1e-4, rtol=1e-4)

    print("KERNEL_OK")
</pallas_src>

<mosaic_0001>
module attributes {stable_mosaic.version = 11 : i64} {
  func.func @_fnn_kernel(%arg0: i32, %arg1: memref<8x256xf32, #tpu.memory_space<vmem>>, %arg2: memref<256x128xf32, #tpu.memory_space<vmem>>, %arg3: memref<1x128xf32, #tpu.memory_space<vmem>>, %arg4: memref<128x128xf32, #tpu.memory_space<vmem>>, %arg5: memref<1x128xf32, #tpu.memory_space<vmem>>, %arg6: memref<128x128xf32, #tpu.memory_space<vmem>>, %arg7: memref<1x128xf32, #tpu.memory_space<vmem>>, %arg8: memref<128x128xf32, #tpu.memory_space<vmem>>, %arg9: memref<1x128xf32, #tpu.memory_space<vmem>>, %arg10: memref<128x128xf32, #tpu.memory_space<vmem>>, %arg11: memref<1x128xf32, #tpu.memory_space<vmem>>, %arg12: memref<8x128xf32, #tpu.memory_space<vmem>>) attributes {dimension_semantics = [#tpu.dimension_semantics<parallel>], iteration_bounds = array<i64: 1>, scalar_prefetch = 0 : i64, scratch_operands = 0 : i64, tpu.core_type = #tpu.core_type<tc>, window_params = [{transform_indices = @transform_0, window_bounds = array<i64: 8, 256>}, {pipeline_mode = #tpu.pipeline_mode<synchronous>, transform_indices = @transform_1, window_bounds = array<i64: 256, 128>}, {pipeline_mode = #tpu.pipeline_mode<synchronous>, transform_indices = @transform_2, window_bounds = array<i64: 1, 128>}, {pipeline_mode = #tpu.pipeline_mode<synchronous>, transform_indices = @transform_3, window_bounds = array<i64: 128, 128>}, {pipeline_mode = #tpu.pipeline_mode<synchronous>, transform_indices = @transform_4, window_bounds = array<i64: 1, 128>}, {pipeline_mode = #tpu.pipeline_mode<synchronous>, transform_indices = @transform_5, window_bounds = array<i64: 128, 128>}, {pipeline_mode = #tpu.pipeline_mode<synchronous>, transform_indices = @transform_6, window_bounds = array<i64: 1, 128>}, {pipeline_mode = #tpu.pipeline_mode<synchronous>, transform_indices = @transform_7, window_bounds = array<i64: 128, 128>}, {pipeline_mode = #tpu.pipeline_mode<synchronous>, transform_indices = @transform_8, window_bounds = array<i64: 1, 128>}, {pipeline_mode = #tpu.pipeline_mode<synchronous>, transform_indices = @transform_9, window_bounds = array<i64: 128, 128>}, {pipeline_mode = #tpu.pipeline_mode<synchronous>, transform_indices = @transform_10, window_bounds = array<i64: 1, 128>}, {transform_indices = @transform_11, window_bounds = array<i64: 8, 128>}]} {
    %c0 = arith.constant 0 : index
    %c0_0 = arith.constant 0 : index
    %0 = vector.load %arg1[%c0, %c0_0] : memref<8x256xf32, #tpu.memory_space<vmem>>, vector<8x256xf32>
    %c0_1 = arith.constant 0 : index
    %c0_2 = arith.constant 0 : index
    %1 = vector.load %arg2[%c0_1, %c0_2] : memref<256x128xf32, #tpu.memory_space<vmem>>, vector<256x128xf32>
    %c0_3 = arith.constant 0 : index
    %c0_4 = arith.constant 0 : index
    %2 = vector.load %arg3[%c0_3, %c0_4] : memref<1x128xf32, #tpu.memory_space<vmem>>, vector<1x128xf32>
    %cst = arith.constant dense<0.000000e+00> : vector<8x128xf32>
    %3 = tpu.matmul %0, %1, %cst {dimension_numbers = #tpu.dot_dimension_numbers<[1], [0], [0], [1], [0, 0, 1, 1], [], []>} : vector<8x256xf32>, vector<256x128xf32>, vector<8x128xf32> -> vector<8x128xf32>
    %4 = vector.broadcast %2 : vector<1x128xf32> to vector<8x128xf32>
    %5 = arith.addf %3, %4 : vector<8x128xf32>
    %cst_5 = arith.constant 0.000000e+00 : f32
    %6 = vector.broadcast %cst_5 : f32 to vector<8x128xf32>
    %7 = arith.maximumf %5, %6 : vector<8x128xf32>
    %c0_6 = arith.constant 0 : index
    %c0_7 = arith.constant 0 : index
    %8 = vector.load %arg4[%c0_6, %c0_7] : memref<128x128xf32, #tpu.memory_space<vmem>>, vector<128x128xf32>
    %c0_8 = arith.constant 0 : index
    %c0_9 = arith.constant 0 : index
    %9 = vector.load %arg5[%c0_8, %c0_9] : memref<1x128xf32, #tpu.memory_space<vmem>>, vector<1x128xf32>
    %cst_10 = arith.constant dense<0.000000e+00> : vector<8x128xf32>
    %10 = tpu.matmul %7, %8, %cst_10 {dimension_numbers = #tpu.dot_dimension_numbers<[1], [0], [0], [1], [0, 0, 1, 1], [], []>} : vector<8x128xf32>, vector<128x128xf32>, vector<8x128xf32> -> vector<8x128xf32>
    %11 = vector.broadcast %9 : vector<1x128xf32> to vector<8x128xf32>
    %12 = arith.addf %10, %11 : vector<8x128xf32>
    %cst_11 = arith.constant 0.000000e+00 : f32
    %13 = vector.broadcast %cst_11 : f32 to vector<8x128xf32>
    %14 = arith.maximumf %12, %13 : vector<8x128xf32>
    %c0_12 = arith.constant 0 : index
    %c0_13 = arith.constant 0 : index
    %15 = vector.load %arg6[%c0_12, %c0_13] : memref<128x128xf32, #tpu.memory_space<vmem>>, vector<128x128xf32>
    %c0_14 = arith.constant 0 : index
    %c0_15 = arith.constant 0 : index
    %16 = vector.load %arg7[%c0_14, %c0_15] : memref<1x128xf32, #tpu.memory_space<vmem>>, vector<1x128xf32>
    %cst_16 = arith.constant dense<0.000000e+00> : vector<8x128xf32>
    %17 = tpu.matmul %14, %15, %cst_16 {dimension_numbers = #tpu.dot_dimension_numbers<[1], [0], [0], [1], [0, 0, 1, 1], [], []>} : vector<8x128xf32>, vector<128x128xf32>, vector<8x128xf32> -> vector<8x128xf32>
    %18 = vector.broadcast %16 : vector<1x128xf32> to vector<8x128xf32>
    %19 = arith.addf %17, %18 : vector<8x128xf32>
    %cst_17 = arith.constant 0.000000e+00 : f32
    %20 = vector.broadcast %cst_17 : f32 to vector<8x128xf32>
    %21 = arith.maximumf %19, %20 : vector<8x128xf32>
    %c0_18 = arith.constant 0 : index
    %c0_19 = arith.constant 0 : index
    %22 = vector.load %arg8[%c0_18, %c0_19] : memref<128x128xf32, #tpu.memory_space<vmem>>, vector<128x128xf32>
    %c0_20 = arith.constant 0 : index
    %c0_21 = arith.constant 0 : index
    %23 = vector.load %arg9[%c0_20, %c0_21] : memref<1x128xf32, #tpu.memory_space<vmem>>, vector<1x128xf32>
    %cst_22 = arith.constant dense<0.000000e+00> : vector<8x128xf32>
    %24 = tpu.matmul %21, %22, %cst_22 {dimension_numbers = #tpu.dot_dimension_numbers<[1], [0], [0], [1], [0, 0, 1, 1], [], []>} : vector<8x128xf32>, vector<128x128xf32>, vector<8x128xf32> -> vector<8x128xf32>
    %25 = vector.broadcast %23 : vector<1x128xf32> to vector<8x128xf32>
    %26 = arith.addf %24, %25 : vector<8x128xf32>
    %cst_23 = arith.constant 0.000000e+00 : f32
    %27 = vector.broadcast %cst_23 : f32 to vector<8x128xf32>
    %28 = arith.maximumf %26, %27 : vector<8x128xf32>
    %c0_24 = arith.constant 0 : index
    %c0_25 = arith.constant 0 : index
    %29 = vector.load %arg10[%c0_24, %c0_25] : memref<128x128xf32, #tpu.memory_space<vmem>>, vector<128x128xf32>
    %c0_26 = arith.constant 0 : index
    %c0_27 = arith.constant 0 : index
    %30 = vector.load %arg11[%c0_26, %c0_27] : memref<1x128xf32, #tpu.memory_space<vmem>>, vector<1x128xf32>
    %cst_28 = arith.constant dense<0.000000e+00> : vector<8x128xf32>
    %31 = tpu.matmul %28, %29, %cst_28 {dimension_numbers = #tpu.dot_dimension_numbers<[1], [0], [0], [1], [0, 0, 1, 1], [], []>} : vector<8x128xf32>, vector<128x128xf32>, vector<8x128xf32> -> vector<8x128xf32>
    %32 = vector.broadcast %30 : vector<1x128xf32> to vector<8x128xf32>
    %33 = arith.addf %31, %32 : vector<8x128xf32>
    %c0_29 = arith.constant 0 : index
    %c0_30 = arith.constant 0 : index
    %34 = vector.load %arg12[%c0_29, %c0_30] : memref<8x128xf32, #tpu.memory_space<vmem>>, vector<8x128xf32>
    tpu.vector_store %arg12[%c0_29, %c0_30], %33 {strides = array<i32>} : memref<8x128xf32, #tpu.memory_space<vmem>>, vector<8x128xf32>,
    return
  }
  func.func @transform_0(%arg0: i32) -> (i32, i32) {
    %c0_i32 = arith.constant 0 : i32
    %c0_i32_0 = arith.constant 0 : i32
    return %arg0, %c0_i32 : i32, i32
  }
  func.func @transform_1(%arg0: i32) -> (i32, i32) {
    %c0_i32 = arith.constant 0 : i32
    %c0_i32_0 = arith.constant 0 : i32
    %c0_i32_1 = arith.constant 0 : i32
    return %c0_i32, %c0_i32_0 : i32, i32
  }
  func.func @transform_2(%arg0: i32) -> (i32, i32) {
    %c0_i32 = arith.constant 0 : i32
    %c0_i32_0 = arith.constant 0 : i32
    %c0_i32_1 = arith.constant 0 : i32
    return %c0_i32, %c0_i32_0 : i32, i32
  }
  func.func @transform_3(%arg0: i32) -> (i32, i32) {
    %c0_i32 = arith.constant 0 : i32
    %c0_i32_0 = arith.constant 0 : i32
    %c0_i32_1 = arith.constant 0 : i32
    return %c0_i32, %c0_i32_0 : i32, i32
  }
  func.func @transform_4(%arg0: i32) -> (i32, i32) {
    %c0_i32 = arith.constant 0 : i32
    %c0_i32_0 = arith.constant 0 : i32
    %c0_i32_1 = arith.constant 0 : i32
    return %c0_i32, %c0_i32_0 : i32, i32
  }
  func.func @transform_5(%arg0: i32) -> (i32, i32) {
    %c0_i32 = arith.constant 0 : i32
    %c0_i32_0 = arith.constant 0 : i32
    %c0_i32_1 = arith.constant 0 : i32
    return %c0_i32, %c0_i32_0 : i32, i32
  }
  func.func @transform_6(%arg0: i32) -> (i32, i32) {
    %c0_i32 = arith.constant 0 : i32
    %c0_i32_0 = arith.constant 0 : i32
    %c0_i32_1 = arith.constant 0 : i32
    return %c0_i32, %c0_i32_0 : i32, i32
  }
  func.func @transform_7(%arg0: i32) -> (i32, i32) {
    %c0_i32 = arith.constant 0 : i32
    %c0_i32_0 = arith.constant 0 : i32
    %c0_i32_1 = arith.constant 0 : i32
    return %c0_i32, %c0_i32_0 : i32, i32
  }
  func.func @transform_8(%arg0: i32) -> (i32, i32) {
    %c0_i32 = arith.constant 0 : i32
    %c0_i32_0 = arith.constant 0 : i32
    %c0_i32_1 = arith.constant 0 : i32
    return %c0_i32, %c0_i32_0 : i32, i32
  }
  func.func @transform_9(%arg0: i32) -> (i32, i32) {
    %c0_i32 = arith.constant 0 : i32
    %c0_i32_0 = arith.constant 0 : i32
    %c0_i32_1 = arith.constant 0 : i32
    return %c0_i32, %c0_i32_0 : i32, i32
  }
  func.func @transform_10(%arg0: i32) -> (i32, i32) {
    %c0_i32 = arith.constant 0 : i32
    %c0_i32_0 = arith.constant 0 : i32
    %c0_i32_1 = arith.constant 0 : i32
    return %c0_i32, %c0_i32_0 : i32, i32
  }
  func.func @transform_11(%arg0: i32) -> (i32, i32) {
    %c0_i32 = arith.constant 0 : i32
    %c0_i32_0 = arith.constant 0 : i32
    return %arg0, %c0_i32 : i32, i32
  }
}

</mosaic_0001>

<llo_original>
// kernel: _fnn_forward_impl.1
$region0: #{_fnn_forward_impl.1}
  #allocation0 [shape = 'u32[]', space=smem, size = 0x4, offset = 0x4, fixed_abs, tag = 'smem constant byte address 0x4 - core index']
  #allocation1 [shape = 'u32[144,128]{1,0:T(1,128)}', space=vmem, size = 0x12000, scoped, tag = 'internal scratch']
  %s0 = inlined_call_operand.vmem [shape: f32[8,256], index: 0, kind: input, shape index: {}]
  %s1 = inlined_call_operand.hbm [shape: f32[256,128], index: 1, kind: input, shape index: {}]
  %s2 = inlined_call_operand.vmem [shape: f32[1,128], index: 2, kind: input, shape index: {}]
  %s3 = inlined_call_operand.hbm [shape: f32[128,128], index: 3, kind: input, shape index: {}]
  %s4 = inlined_call_operand.vmem [shape: f32[1,128], index: 4, kind: input, shape index: {}]
  %s5 = inlined_call_operand.hbm [shape: f32[128,128], index: 5, kind: input, shape index: {}]
  %s6 = inlined_call_operand.vmem [shape: f32[1,128], index: 6, kind: input, shape index: {}]
  %s7 = inlined_call_operand.hbm [shape: f32[128,128], index: 7, kind: input, shape index: {}]
  %s8 = inlined_call_operand.vmem [shape: f32[1,128], index: 8, kind: input, shape index: {}]
  %s9 = inlined_call_operand.hbm [shape: f32[128,128], index: 9, kind: input, shape index: {}]
  %s10 = inlined_call_operand.vmem [shape: f32[1,128], index: 10, kind: input, shape index: {}]
  %s11 = inlined_call_operand.vmem [shape: f32[8,128], index: 11, kind: output, shape index: {}]
  %s12 = sld [smem:[#allocation0]]
  $region74: #{_fnn_forward_impl.1} parent=0
    _
  %s14 = ssub.s32 1, %s12
  %s15 = scalar_select 0, %s14, %s12
  $region1: #{_fnn_forward_impl.1} parent=0
    #allocation2 [shape = 'u8[131072]{0}', space=vmem, size = 0x20000, scoped, tag = 'input window, operand 1, single buffered']
    #allocation3 [shape = 's32[1]{0}', space=sflag, size = 0x4, scoped, tag = 'scoped memory for _fnn_forward_impl.1']
    #allocation4 [shape = 'u8[65536]{0}', space=vmem, size = 0x10000, scoped, tag = 'input window, operand 3, single buffered']
    #allocation5 [shape = 's32[1]{0}', space=sflag, size = 0x4, scoped, tag = 'scoped memory for _fnn_forward_impl.1']
    #allocation6 [shape = 'u8[65536]{0}', space=vmem, size = 0x10000, scoped, tag = 'input window, operand 5, single buffered']
    #allocation7 [shape = 'u8[65536]{0}', space=vmem, size = 0x10000, scoped, tag = 'input window, operand 7, single buffered']
    #allocation8 [shape = 's32[1]{0}', space=sflag, size = 0x4, scoped, tag = 'scoped memory for _fnn_forward_impl.1']
    #allocation9 [shape = 'u8[65536]{0}', space=vmem, size = 0x10000, scoped, tag = 'input window, operand 9, single buffered']
    %16 = vsyncpa [#allocation3], 0
    %17 = vsyncpa [#allocation5], 0
    %18 = vsyncpa [#allocation8], 0
    // Predicated region
    $region2: #{_fnn_forward_impl.1} parent=1 // pred_check
      _
    $region3: #{_fnn_forward_impl.1} parent=1 // pred_check_branch
      %20 = sbr.rel (0) target = $region5
    $region4: #{_fnn_forward_impl.1} parent=1 // pred_region
      _
    $region5: #{_fnn_forward_impl.1} parent=1 // pred_fallthru
      _
    // Predicated region
    $region6: #{_fnn_forward_impl.1} parent=1 // pred_check
      _
    $region7: #{_fnn_forward_impl.1} parent=1 // pred_check_branch
      %22 = sbr.rel (0) target = $region9
    $region8: #{_fnn_forward_impl.1} parent=1 // pred_region
      %s24 = ssub.s32 4096, 4096
      %25 = vsyncadd [#allocation3], %s24
      %s26 = sshll.u32 [#allocation2], 4
      %s27 = int_to_ptr.vmem [resolvable:$true] %s26
      %32 = dma.hbm_to_vmem [thread:$0]  %s1, 4096, %s27, [#allocation3], 128, 128, 8
    $region9: #{_fnn_forward_impl.1} parent=1 // pred_fallthru
      _
    // Predicated region
    $region10: #{_fnn_forward_impl.1} parent=1 // pred_check
      _
    $region11: #{_fnn_forward_impl.1} parent=1 // pred_check_branch
      %34 = sbr.rel (0) target = $region13
    $region12: #{_fnn_forward_impl.1} parent=1 // pred_region
      _
    $region13: #{_fnn_forward_impl.1} parent=1 // pred_fallthru
      _
    // Predicated region
    $region14: #{_fnn_forward_impl.1} parent=1 // pred_check
      _
    $region15: #{_fnn_forward_impl.1} parent=1 // pred_check_branch
      %36 = sbr.rel (0) target = $region17
    $region16: #{_fnn_forward_impl.1} parent=1 // pred_region
      %s38 = ssub.s32 2048, 2048
      %39 = vsyncadd [#allocation5], %s38
      %s40 = sshll.u32 [#allocation4], 4
      %s41 = int_to_ptr.vmem [resolvable:$true] %s40
      %46 = dma.hbm_to_vmem [thread:$0]  %s3, 2048, %s41, [#allocation5], 128, 128, 8
    $region17: #{_fnn_forward_impl.1} parent=1 // pred_fallthru
      _
    // Predicated region
    $region18: #{_fnn_forward_impl.1} parent=1 // pred_check
      _
    $region19: #{_fnn_forward_impl.1} parent=1 // pred_check_branch
      %48 = sbr.rel (0) target = $region21
    $region20: #{_fnn_forward_impl.1} parent=1 // pred_region
      _
    $region21: #{_fnn_forward_impl.1} parent=1 // pred_fallthru
      _
    // Predicated region
    $region22: #{_fnn_forward_impl.1} parent=1 // pred_check
      _
    $region23: #{_fnn_forward_impl.1} parent=1 // pred_check_branch
      %50 = sbr.rel (0) target = $region25
    $region24: #{_fnn_forward_impl.1} parent=1 // pred_region
      %s52 = ssub.s32 2048, 2048
      %53 = vsyncadd [#allocation5], %s52
      %s54 = sshll.u32 [#allocation6], 4
      %s55 = int_to_ptr.vmem [resolvable:$true] %s54
      %60 = dma.hbm_to_vmem [thread:$0]  %s5, 2048, %s55, [#allocation5], 128, 128, 8
    $region25: #{_fnn_forward_impl.1} parent=1 // pred_fallthru
      _
    // Predicated region
    $region26: #{_fnn_forward_impl.1} parent=1 // pred_check
      _
    $region27: #{_fnn_forward_impl.1} parent=1 // pred_check_branch
      %62 = sbr.rel (0) target = $region29
    $region28: #{_fnn_forward_impl.1} parent=1 // pred_region
      _
    $region29: #{_fnn_forward_impl.1} parent=1 // pred_fallthru
      _
    // Predicated region
    $region30: #{_fnn_forward_impl.1} parent=1 // pred_check
      _
    $region31: #{_fnn_forward_impl.1} parent=1 // pred_check_branch
      %64 = sbr.rel (0) target = $region33
    $region32: #{_fnn_forward_impl.1} parent=1 // pred_region
      %s66 = ssub.s32 2048, 2048
      %67 = vsyncadd [#allocation8], %s66
      %s68 = sshll.u32 [#allocation7], 4
      %s69 = int_to_ptr.vmem [resolvable:$true] %s68
      %74 = dma.hbm_to_vmem [thread:$0]  %s7, 2048, %s69, [#allocation8], 128, 128, 8
    $region33: #{_fnn_forward_impl.1} parent=1 // pred_fallthru
      _
    // Predicated region
    $region34: #{_fnn_forward_impl.1} parent=1 // pred_check
      _
    $region35: #{_fnn_forward_impl.1} parent=1 // pred_check_branch
      %76 = sbr.rel (0) target = $region37
    $region36: #{_fnn_forward_impl.1} parent=1 // pred_region
      _
    $region37: #{_fnn_forward_impl.1} parent=1 // pred_fallthru
      _
    // Predicated region
    $region38: #{_fnn_forward_impl.1} parent=1 // pred_check
      _
    $region39: #{_fnn_forward_impl.1} parent=1 // pred_check_branch
      %78 = sbr.rel (0) target = $region41
    $region40: #{_fnn_forward_impl.1} parent=1 // pred_region
      %s80 = ssub.s32 2048, 2048
      %81 = vsyncadd [#allocation8], %s80
      %s82 = sshll.u32 [#allocation9], 4
      %s83 = int_to_ptr.vmem [resolvable:$true] %s82
      %88 = dma.hbm_to_vmem [thread:$0]  %s9, 2048, %s83, [#allocation8], 128, 128, 8
    $region41: #{_fnn_forward_impl.1} parent=1 // pred_fallthru
      _
    // Predicated region
    $region42: #{_fnn_forward_impl.1} parent=1 // pred_check
      _
    $region43: #{_fnn_forward_impl.1} parent=1 // pred_check_branch
      %90 = sbr.rel (0) target = $region45
    $region44: #{_fnn_forward_impl.1} parent=1 // pred_region
      _
    $region45: #{_fnn_forward_impl.1} parent=1 // pred_fallthru
      _
    // Predicated region
    $region46: #{_fnn_forward_impl.1} parent=1 // pred_check
      _
    $region47: #{_fnn_forward_impl.1} parent=1 // pred_check_branch
      %92 = sbr.rel (0) target = $region49
    $region48: #{_fnn_forward_impl.1} parent=1 // pred_region
      %93 = dma.done [#allocation3], 4096
    $region49: #{_fnn_forward_impl.1} parent=1 // pred_fallthru
      _
    // Predicated region
    $region50: #{_fnn_forward_impl.1} parent=1 // pred_check
      _
    $region51: #{_fnn_forward_impl.1} parent=1 // pred_check_branch
      %95 = sbr.rel (0) target = $region53
    $region52: #{_fnn_forward_impl.1} parent=1 // pred_region
      %96 = dma.done [#allocation5], 2048
    $region53: #{_fnn_forward_impl.1} parent=1 // pred_fallthru
      _
    // Predicated region
    $region54: #{_fnn_forward_impl.1} parent=1 // pred_check
      _
    $region55: #{_fnn_forward_impl.1} parent=1 // pred_check_branch
      %98 = sbr.rel (0) target = $region57
    $region56: #{_fnn_forward_impl.1} parent=1 // pred_region
      %99 = dma.done [#allocation5], 2048
    $region57: #{_fnn_forward_impl.1} parent=1 // pred_fallthru
      _
    // Predicated region
    $region58: #{_fnn_forward_impl.1} parent=1 // pred_check
      _
    $region59: #{_fnn_forward_impl.1} parent=1 // pred_check_branch
      %101 = sbr.rel (0) target = $region61
    $region60: #{_fnn_forward_impl.1} parent=1 // pred_region
      %102 = dma.done [#allocation8], 2048
    $region61: #{_fnn_forward_impl.1} parent=1 // pred_fallthru
      _
    // Predicated region
    $region62: #{_fnn_forward_impl.1} parent=1 // pred_check
      _
    $region63: #{_fnn_forward_impl.1} parent=1 // pred_check_branch
      %104 = sbr.rel (0) target = $region65
    $region64: #{_fnn_forward_impl.1} parent=1 // pred_region
      %105 = dma.done [#allocation8], 2048
    $region65: #{_fnn_forward_impl.1} parent=1 // pred_fallthru
      _
    %v106 = vld [vmem:[%s0] sm:$0xff]
    %v107 = vld [vmem:[%s0 + $0x8] sm:$0xff]
    %v108 = vld [vmem:[#allocation2] sm:$0xff]
    %v109 = vld [vmem:[#allocation2 + $0x8] sm:$0xff]
    %v110 = vld [vmem:[#allocation2 + $0x10] sm:$0xff]
    %v111 = vld [vmem:[#allocation2 + $0x18] sm:$0xff]
    %v112 = vld [vmem:[#allocation2 + $0x20] sm:$0xff]
    %v113 = vld [vmem:[#allocation2 + $0x28] sm:$0xff]
    %v114 = vld [vmem:[#allocation2 + $0x30] sm:$0xff]
    %v115 = vld [vmem:[#allocation2 + $0x38] sm:$0xff]
    %v116 = vld [vmem:[#allocation2 + $0x40] sm:$0xff]
    %v117 = vld [vmem:[#allocation2 + $0x48] sm:$0xff]
    %v118 = vld [vmem:[#allocation2 + $0x50] sm:$0xff]
    %v119 = vld [vmem:[#allocation2 + $0x58] sm:$0xff]
    %v120 = vld [vmem:[#allocation2 + $0x60] sm:$0xff]
    %v121 = vld [vmem:[#allocation2 + $0x68] sm:$0xff]
    %v122 = vld [vmem:[#allocation2 + $0x70] sm:$0xff]
    %v123 = vld [vmem:[#allocation2 + $0x78] sm:$0xff]
    %v124 = vld [vmem:[#allocation2 + $0x80] sm:$0xff]
    %v125 = vld [vmem:[#allocation2 + $0x88] sm:$0xff]
    %v126 = vld [vmem:[#allocation2 + $0x90] sm:$0xff]
    %v127 = vld [vmem:[#allocation2 + $0x98] sm:$0xff]
    %v128 = vld [vmem:[#allocation2 + $0xa0] sm:$0xff]
    %v129 = vld [vmem:[#allocation2 + $0xa8] sm:$0xff]
    %v130 = vld [vmem:[#allocation2 + $0xb0] sm:$0xff]
    %v131 = vld [vmem:[#allocation2 + $0xb8] sm:$0xff]
    %v132 = vld [vmem:[#allocation2 + $0xc0] sm:$0xff]
    %v133 = vld [vmem:[#allocation2 + $0xc8] sm:$0xff]
    %v134 = vld [vmem:[#allocation2 + $0xd0] sm:$0xff]
    %v135 = vld [vmem:[#allocation2 + $0xd8] sm:$0xff]
    %v136 = vld [vmem:[#allocation2 + $0xe0] sm:$0xff]
    %v137 = vld [vmem:[#allocation2 + $0xe8] sm:$0xff]
    %v138 = vld [vmem:[#allocation2 + $0xf0] sm:$0xff]
    %v139 = vld [vmem:[#allocation2 + $0xf8] sm:$0xff]
    %v140 = vld [vmem:[%s2] sm:$0x1]
    %v142 = vlaneseq
    %v143 = vshrl.u32 %v142, 7
    %v144 = vsub.s32 0, %v143
    %v145 = vrot.slane %v140, %v144
    %147 = vmatprep.subr.mxu0 0.0
    %148 = vmatpush1.msra.mxu0 %v123
    %149 = vmatprep.subr.mxu0 0.0
    %150 = vmatpush1.msra.mxu0 %v122
    %151 = vmatprep.subr.mxu0 0.0
    %152 = vmatpush1.msra.mxu0 %v121
    %153 = vmatprep.subr.mxu0 0.0
    %154 = vmatpush1.msra.mxu0 %v120
    %155 = vmatprep.subr.mxu0 0.0
    %156 = vmatpush1.msra.mxu0 %v119
    %157 = vmatprep.subr.mxu0 0.0
    %158 = vmatpush1.msra.mxu0 %v118
    %159 = vmatprep.subr.mxu0 0.0
    %160 = vmatpush1.msra.mxu0 %v117
    %161 = vmatprep.subr.mxu0 0.0
    %162 = vmatpush1.msra.mxu0 %v116
    %163 = vmatprep.subr.mxu0 0.0
    %164 = vmatpush1.msra.mxu0 %v115
    %165 = vmatprep.subr.mxu0 0.0
    %166 = vmatpush1.msra.mxu0 %v114
    %167 = vmatprep.subr.mxu0 0.0
    %168 = vmatpush1.msra.mxu0 %v113
    %169 = vmatprep.subr.mxu0 0.0
    %170 = vmatpush1.msra.mxu0 %v112
    %171 = vmatprep.subr.mxu0 0.0
    %172 = vmatpush1.msra.mxu0 %v111
    %173 = vmatprep.subr.mxu0 0.0
    %174 = vmatpush1.msra.mxu0 %v110
    %175 = vmatprep.subr.mxu0 0.0
    %176 = vmatpush1.msra.mxu0 %v109
    %177 = vmatprep.subr.mxu0 0.0
    %178 = vmatpush1.msra.mxu0 %v108
    %179 = vmatprep.subr.mxu0 0.0
    %180 = vmatpush2.msra.mxu0 %v139
    %181 = vmatprep.subr.mxu0 0.0
    %182 = vmatpush2.msra.mxu0 %v138
    %183 = vmatprep.subr.mxu0 0.0
    %184 = vmatpush2.msra.mxu0 %v137
    %185 = vmatprep.subr.mxu0 0.0
    %186 = vmatpush2.msra.mxu0 %v136
    %187 = vmatprep.subr.mxu0 0.0
    %188 = vmatpush2.msra.mxu0 %v135
    %189 = vmatprep.subr.mxu0 0.0
    %190 = vmatpush2.msra.mxu0 %v134
    %191 = vmatprep.subr.mxu0 0.0
    %192 = vmatpush2.msra.mxu0 %v133
    %193 = vmatprep.subr.mxu0 0.0
    %194 = vmatpush2.msra.mxu0 %v132
    %195 = vmatprep.subr.mxu0 0.0
    %196 = vmatpush2.msra.mxu0 %v131
    %197 = vmatprep.subr.mxu0 0.0
    %198 = vmatpush2.msra.mxu0 %v130
    %199 = vmatprep.subr.mxu0 0.0
    %200 = vmatpush2.msra.mxu0 %v129
    %201 = vmatprep.subr.mxu0 0.0
    %202 = vmatpush2.msra.mxu0 %v128
    %203 = vmatprep.subr.mxu0 0.0
    %204 = vmatpush2.msra.mxu0 %v127
    %205 = vmatprep.subr.mxu0 0.0
    %206 = vmatpush2.msra.mxu0 %v126
    %207 = vmatprep.subr.mxu0 0.0
    %208 = vmatpush2.msra.mxu0 %v125
    %209 = vmatprep.subr.mxu0 0.0
    %210 = vmatpush2.msra.mxu0 %v124
    %211 = vmatprep.mubr.f32.mxu0 %v107
    %212 = vmatmul.mubr.f32.gmra.mxu0 %v106
    %v213 = vpop.f32.mrf.mxu0
    %v214 = vadd.f32 %v145, %v213
    %v215 = vpop.f32.mrf.mxu0
    %216 = vdwg.mxu0
    %v217 = vmax.f32 %v214, 0.0
    %v218 = vld [vmem:[#allocation4] sm:$0xff]
    %v219 = vld [vmem:[#allocation4 + $0x8] sm:$0xff]
    %v220 = vld [vmem:[#allocation4 + $0x10] sm:$0xff]
    %v221 = vld [vmem:[#allocation4 + $0x18] sm:$0xff]
    %v222 = vld [vmem:[#allocation4 + $0x20] sm:$0xff]
    %v223 = vld [vmem:[#allocation4 + $0x28] sm:$0xff]
    %v224 = vld [vmem:[#allocation4 + $0x30] sm:$0xff]
    %v225 = vld [vmem:[#allocation4 + $0x38] sm:$0xff]
    %v226 = vld [vmem:[#allocation4 + $0x40] sm:$0xff]
    %v227 = vld [vmem:[#allocation4 + $0x48] sm:$0xff]
    %v228 = vld [vmem:[#allocation4 + $0x50] sm:$0xff]
    %v229 = vld [vmem:[#allocation4 + $0x58] sm:$0xff]
    %v230 = vld [vmem:[#allocation4 + $0x60] sm:$0xff]
    %v231 = vld [vmem:[#allocation4 + $0x68] sm:$0xff]
    %v232 = vld [vmem:[#allocation4 + $0x70] sm:$0xff]
    %v233 = vld [vmem:[#allocation4 + $0x78] sm:$0xff]
    %v234 = vld [vmem:[%s4] sm:$0x1]
    %v236 = vlaneseq
    %v237 = vshrl.u32 %v236, 7
    %v238 = vsub.s32 0, %v237
    %v239 = vrot.slane %v234, %v238
    %241 = vmatprep.subr.mxu0 0.0
    %242 = vmatpush1.msra.mxu0 %v233
    %243 = vmatprep.subr.mxu0 0.0
    %244 = vmatpush1.msra.mxu0 %v232
    %245 = vmatprep.subr.mxu0 0.0
    %246 = vmatpush1.msra.mxu0 %v231
    %247 = vmatprep.subr.mxu0 0.0
    %248 = vmatpush1.msra.mxu0 %v230
    %249 = vmatprep.subr.mxu0 0.0
    %250 = vmatpush1.msra.mxu0 %v229
    %251 = vmatprep.subr.mxu0 0.0
    %252 = vmatpush1.msra.mxu0 %v228
    %253 = vmatprep.subr.mxu0 0.0
    %254 = vmatpush1.msra.mxu0 %v227
    %255 = vmatprep.subr.mxu0 0.0
    %256 = vmatpush1.msra.mxu0 %v226
    %257 = vmatprep.subr.mxu0 0.0
    %258 = vmatpush1.msra.mxu0 %v225
    %259 = vmatprep.subr.mxu0 0.0
    %260 = vmatpush1.msra.mxu0 %v224
    %261 = vmatprep.subr.mxu0 0.0
    %262 = vmatpush1.msra.mxu0 %v223
    %263 = vmatprep.subr.mxu0 0.0
    %264 = vmatpush1.msra.mxu0 %v222
    %265 = vmatprep.subr.mxu0 0.0
    %266 = vmatpush1.msra.mxu0 %v221
    %267 = vmatprep.subr.mxu0 0.0
    %268 = vmatpush1.msra.mxu0 %v220
    %269 = vmatprep.subr.mxu0 0.0
    %270 = vmatpush1.msra.mxu0 %v219
    %271 = vmatprep.subr.mxu0 0.0
    %272 = vmatpush1.msra.mxu0 %v218
    %273 = vmatprep.subr.mxu0 0.0
    %274 = vmatpush2.msra.mxu0 0.0
    %275 = vmatprep.subr.mxu0 0.0
    %276 = vmatpush2.msra.mxu0 0.0
    %277 = vmatprep.subr.mxu0 0.0
    %278 = vmatpush2.msra.mxu0 0.0
    %279 = vmatprep.subr.mxu0 0.0
    %280 = vmatpush2.msra.mxu0 0.0
    %281 = vmatprep.subr.mxu0 0.0
    %282 = vmatpush2.msra.mxu0 0.0
    %283 = vmatprep.subr.mxu0 0.0
    %284 = vmatpush2.msra.mxu0 0.0
    %285 = vmatprep.subr.mxu0 0.0
    %286 = vmatpush2.msra.mxu0 0.0
    %287 = vmatprep.subr.mxu0 0.0
    %288 = vmatpush2.msra.mxu0 0.0
    %289 = vmatprep.subr.mxu0 0.0
    %290 = vmatpush2.msra.mxu0 0.0
    %291 = vmatprep.subr.mxu0 0.0
    %292 = vmatpush2.msra.mxu0 0.0
    %293 = vmatprep.subr.mxu0 0.0
    %294 = vmatpush2.msra.mxu0 0.0
    %295 = vmatprep.subr.mxu0 0.0
    %296 = vmatpush2.msra.mxu0 0.0
    %297 = vmatprep.subr.mxu0 0.0
    %298 = vmatpush2.msra.mxu0 0.0
    %299 = vmatprep.subr.mxu0 0.0
    %300 = vmatpush2.msra.mxu0 0.0
    %301 = vmatprep.subr.mxu0 0.0
    %302 = vmatpush2.msra.mxu0 0.0
    %303 = vmatprep.subr.mxu0 0.0
    %304 = vmatpush2.msra.mxu0 0.0
    %305 = vmatprep.mubr.f32.mxu0 0.0
    %306 = vmatmul.mubr.f32.gmra.mxu0 %v217
    %v307 = vpop.f32.mrf.mxu0
    %v308 = vadd.f32 %v239, %v307
    %v309 = vpop.f32.mrf.mxu0
    %310 = vdwg.mxu0
    %v311 = vmax.f32 %v308, 0.0
    %v312 = vld [vmem:[#allocation6] sm:$0xff]
    %v313 = vld [vmem:[#allocation6 + $0x8] sm:$0xff]
    %v314 = vld [vmem:[#allocation6 + $0x10] sm:$0xff]
    %v315 = vld [vmem:[#allocation6 + $0x18] sm:$0xff]
    %v316 = vld [vmem:[#allocation6 + $0x20] sm:$0xff]
    %v317 = vld [vmem:[#allocation6 + $0x28] sm:$0xff]
    %v318 = vld [vmem:[#allocation6 + $0x30] sm:$0xff]
    %v319 = vld [vmem:[#allocation6 + $0x38] sm:$0xff]
    %v320 = vld [vmem:[#allocation6 + $0x40] sm:$0xff]
    %v321 = vld [vmem:[#allocation6 + $0x48] sm:$0xff]
    %v322 = vld [vmem:[#allocation6 + $0x50] sm:$0xff]
    %v323 = vld [vmem:[#allocation6 + $0x58] sm:$0xff]
    %v324 = vld [vmem:[#allocation6 + $0x60] sm:$0xff]
    %v325 = vld [vmem:[#allocation6 + $0x68] sm:$0xff]
    %v326 = vld [vmem:[#allocation6 + $0x70] sm:$0xff]
    %v327 = vld [vmem:[#allocation6 + $0x78] sm:$0xff]
    %v328 = vld [vmem:[%s6] sm:$0x1]
    %v330 = vlaneseq
    %v331 = vshrl.u32 %v330, 7
    %v332 = vsub.s32 0, %v331
    %v333 = vrot.slane %v328, %v332
    %335 = vmatprep.subr.mxu0 0.0
    %336 = vmatpush1.msra.mxu0 %v327
    %337 = vmatprep.subr.mxu0 0.0
    %338 = vmatpush1.msra.mxu0 %v326
    %339 = vmatprep.subr.mxu0 0.0
    %340 = vmatpush1.msra.mxu0 %v325
    %341 = vmatprep.subr.mxu0 0.0
    %342 = vmatpush1.msra.mxu0 %v324
    %343 = vmatprep.subr.mxu0 0.0
    %344 = vmatpush1.msra.mxu0 %v323
    %345 = vmatprep.subr.mxu0 0.0
    %346 = vmatpush1.msra.mxu0 %v322
    %347 = vmatprep.subr.mxu0 0.0
    %348 = vmatpush1.msra.mxu0 %v321
    %349 = vmatprep.subr.mxu0 0.0
    %350 = vmatpush1.msra.mxu0 %v320
    %351 = vmatprep.subr.mxu0 0.0
    %352 = vmatpush1.msra.mxu0 %v319
    %353 = vmatprep.subr.mxu0 0.0
    %354 = vmatpush1.msra.mxu0 %v318
    %355 = vmatprep.subr.mxu0 0.0
    %356 = vmatpush1.msra.mxu0 %v317
    %357 = vmatprep.subr.mxu0 0.0
    %358 = vmatpush1.msra.mxu0 %v316
    %359 = vmatprep.subr.mxu0 0.0
    %360 = vmatpush1.msra.mxu0 %v315
    %361 = vmatprep.subr.mxu0 0.0
    %362 = vmatpush1.msra.mxu0 %v314
    %363 = vmatprep.subr.mxu0 0.0
    %364 = vmatpush1.msra.mxu0 %v313
    %365 = vmatprep.subr.mxu0 0.0
    %366 = vmatpush1.msra.mxu0 %v312
    %367 = vmatprep.subr.mxu0 0.0
    %368 = vmatpush2.msra.mxu0 0.0
    %369 = vmatprep.subr.mxu0 0.0
    %370 = vmatpush2.msra.mxu0 0.0
    %371 = vmatprep.subr.mxu0 0.0
    %372 = vmatpush2.msra.mxu0 0.0
    %373 = vmatprep.subr.mxu0 0.0
    %374 = vmatpush2.msra.mxu0 0.0
    %375 = vmatprep.subr.mxu0 0.0
    %376 = vmatpush2.msra.mxu0 0.0
    %377 = vmatprep.subr.mxu0 0.0
    %378 = vmatpush2.msra.mxu0 0.0
    %379 = vmatprep.subr.mxu0 0.0
    %380 = vmatpush2.msra.mxu0 0.0
    %381 = vmatprep.subr.mxu0 0.0
    %382 = vmatpush2.msra.mxu0 0.0
    %383 = vmatprep.subr.mxu0 0.0
    %384 = vmatpush2.msra.mxu0 0.0
    %385 = vmatprep.subr.mxu0 0.0
    %386 = vmatpush2.msra.mxu0 0.0
    %387 = vmatprep.subr.mxu0 0.0
    %388 = vmatpush2.msra.mxu0 0.0
    %389 = vmatprep.subr.mxu0 0.0
    %390 = vmatpush2.msra.mxu0 0.0
    %391 = vmatprep.subr.mxu0 0.0
    %392 = vmatpush2.msra.mxu0 0.0
    %393 = vmatprep.subr.mxu0 0.0
    %394 = vmatpush2.msra.mxu0 0.0
    %395 = vmatprep.subr.mxu0 0.0
    %396 = vmatpush2.msra.mxu0 0.0
    %397 = vmatprep.subr.mxu0 0.0
    %398 = vmatpush2.msra.mxu0 0.0
    %399 = vmatprep.mubr.f32.mxu0 0.0
    %400 = vmatmul.mubr.f32.gmra.mxu0 %v311
    %v401 = vpop.f32.mrf.mxu0
    %v402 = vadd.f32 %v333, %v401
    %v403 = vpop.f32.mrf.mxu0
    %404 = vdwg.mxu0
    %v405 = vmax.f32 %v402, 0.0
    %v406 = vld [vmem:[#allocation7] sm:$0xff]
    %v407 = vld [vmem:[#allocation7 + $0x8] sm:$0xff]
    %v408 = vld [vmem:[#allocation7 + $0x10] sm:$0xff]
    %v409 = vld [vmem:[#allocation7 + $0x18] sm:$0xff]
    %v410 = vld [vmem:[#allocation7 + $0x20] sm:$0xff]
    %v411 = vld [vmem:[#allocation7 + $0x28] sm:$0xff]
    %v412 = vld [vmem:[#allocation7 + $0x30] sm:$0xff]
    %v413 = vld [vmem:[#allocation7 + $0x38] sm:$0xff]
    %v414 = vld [vmem:[#allocation7 + $0x40] sm:$0xff]
    %v415 = vld [vmem:[#allocation7 + $0x48] sm:$0xff]
    %v416 = vld [vmem:[#allocation7 + $0x50] sm:$0xff]
    %v417 = vld [vmem:[#allocation7 + $0x58] sm:$0xff]
    %v418 = vld [vmem:[#allocation7 + $0x60] sm:$0xff]
    %v419 = vld [vmem:[#allocation7 + $0x68] sm:$0xff]
    %v420 = vld [vmem:[#allocation7 + $0x70] sm:$0xff]
    %v421 = vld [vmem:[#allocation7 + $0x78] sm:$0xff]
    %v422 = vld [vmem:[%s8] sm:$0x1]
    %v424 = vlaneseq
    %v425 = vshrl.u32 %v424, 7
    %v426 = vsub.s32 0, %v425
    %v427 = vrot.slane %v422, %v426
    %429 = vmatprep.subr.mxu0 0.0
    %430 = vmatpush1.msra.mxu0 %v421
    %431 = vmatprep.subr.mxu0 0.0
    %432 = vmatpush1.msra.mxu0 %v420
    %433 = vmatprep.subr.mxu0 0.0
    %434 = vmatpush1.msra.mxu0 %v419
    %435 = vmatprep.subr.mxu0 0.0
    %436 = vmatpush1.msra.mxu0 %v418
    %437 = vmatprep.subr.mxu0 0.0
    %438 = vmatpush1.msra.mxu0 %v417
    %439 = vmatprep.subr.mxu0 0.0
    %440 = vmatpush1.msra.mxu0 %v416
    %441 = vmatprep.subr.mxu0 0.0
    %442 = vmatpush1.msra.mxu0 %v415
    %443 = vmatprep.subr.mxu0 0.0
    %444 = vmatpush1.msra.mxu0 %v414
    %445 = vmatprep.subr.mxu0 0.0
    %446 = vmatpush1.msra.mxu0 %v413
    %447 = vmatprep.subr.mxu0 0.0
    %448 = vmatpush1.msra.mxu0 %v412
    %449 = vmatprep.subr.mxu0 0.0
    %450 = vmatpush1.msra.mxu0 %v411
    %451 = vmatprep.subr.mxu0 0.0
    %452 = vmatpush1.msra.mxu0 %v410
    %453 = vmatprep.subr.mxu0 0.0
    %454 = vmatpush1.msra.mxu0 %v409
    %455 = vmatprep.subr.mxu0 0.0
    %456 = vmatpush1.msra.mxu0 %v408
    %457 = vmatprep.subr.mxu0 0.0
    %458 = vmatpush1.msra.mxu0 %v407
    %459 = vmatprep.subr.mxu0 0.0
    %460 = vmatpush1.msra.mxu0 %v406
    %461 = vmatprep.subr.mxu0 0.0
    %462 = vmatpush2.msra.mxu0 0.0
    %463 = vmatprep.subr.mxu0 0.0
    %464 = vmatpush2.msra.mxu0 0.0
    %465 = vmatprep.subr.mxu0 0.0
    %466 = vmatpush2.msra.mxu0 0.0
    %467 = vmatprep.subr.mxu0 0.0
    %468 = vmatpush2.msra.mxu0 0.0
    %469 = vmatprep.subr.mxu0 0.0
    %470 = vmatpush2.msra.mxu0 0.0
    %471 = vmatprep.subr.mxu0 0.0
    %472 = vmatpush2.msra.mxu0 0.0
    %473 = vmatprep.subr.mxu0 0.0
    %474 = vmatpush2.msra.mxu0 0.0
    %475 = vmatprep.subr.mxu0 0.0
    %476 = vmatpush2.msra.mxu0 0.0
    %477 = vmatprep.subr.mxu0 0.0
    %478 = vmatpush2.msra.mxu0 0.0
    %479 = vmatprep.subr.mxu0 0.0
    %480 = vmatpush2.msra.mxu0 0.0
    %481 = vmatprep.subr.mxu0 0.0
    %482 = vmatpush2.msra.mxu0 0.0
    %483 = vmatprep.subr.mxu0 0.0
    %484 = vmatpush2.msra.mxu0 0.0
    %485 = vmatprep.subr.mxu0 0.0
    %486 = vmatpush2.msra.mxu0 0.0
    %487 = vmatprep.subr.mxu0 0.0
    %488 = vmatpush2.msra.mxu0 0.0
    %489 = vmatprep.subr.mxu0 0.0
    %490 = vmatpush2.msra.mxu0 0.0
    %491 = vmatprep.subr.mxu0 0.0
    %492 = vmatpush2.msra.mxu0 0.0
    %493 = vmatprep.mubr.f32.mxu0 0.0
    %494 = vmatmul.mubr.f32.gmra.mxu0 %v405
    %v495 = vpop.f32.mrf.mxu0
    %v496 = vadd.f32 %v427, %v495
    %v497 = vpop.f32.mrf.mxu0
    %498 = vdwg.mxu0
    %v499 = vmax.f32 %v496, 0.0
    %v500 = vld [vmem:[#allocation9] sm:$0xff]
    %v501 = vld [vmem:[#allocation9 + $0x8] sm:$0xff]
    %v502 = vld [vmem:[#allocation9 + $0x10] sm:$0xff]
    %v503 = vld [vmem:[#allocation9 + $0x18] sm:$0xff]
    %v504 = vld [vmem:[#allocation9 + $0x20] sm:$0xff]
    %v505 = vld [vmem:[#allocation9 + $0x28] sm:$0xff]
    %v506 = vld [vmem:[#allocation9 + $0x30] sm:$0xff]
    %v507 = vld [vmem:[#allocation9 + $0x38] sm:$0xff]
    %v508 = vld [vmem:[#allocation9 + $0x40] sm:$0xff]
    %v509 = vld [vmem:[#allocation9 + $0x48] sm:$0xff]
    %v510 = vld [vmem:[#allocation9 + $0x50] sm:$0xff]
    %v511 = vld [vmem:[#allocation9 + $0x58] sm:$0xff]
    %v512 = vld [vmem:[#allocation9 + $0x60] sm:$0xff]
    %v513 = vld [vmem:[#allocation9 + $0x68] sm:$0xff]
    %v514 = vld [vmem:[#allocation9 + $0x70] sm:$0xff]
    %v515 = vld [vmem:[#allocation9 + $0x78] sm:$0xff]
    %v516 = vld [vmem:[%s10] sm:$0x1]
    %v518 = vlaneseq
    %v519 = vshrl.u32 %v518, 7
    %v520 = vsub.s32 0, %v519
    %v521 = vrot.slane %v516, %v520
    %523 = vmatprep.subr.mxu0 0.0
    %524 = vmatpush1.msra.mxu0 %v515
    %525 = vmatprep.subr.mxu0 0.0
    %526 = vmatpush1.msra.mxu0 %v514
    %527 = vmatprep.subr.mxu0 0.0
    %528 = vmatpush1.msra.mxu0 %v513
    %529 = vmatprep.subr.mxu0 0.0
    %530 = vmatpush1.msra.mxu0 %v512
    %531 = vmatprep.subr.mxu0 0.0
    %532 = vmatpush1.msra.mxu0 %v511
    %533 = vmatprep.subr.mxu0 0.0
    %534 = vmatpush1.msra.mxu0 %v510
    %535 = vmatprep.subr.mxu0 0.0
    %536 = vmatpush1.msra.mxu0 %v509
    %537 = vmatprep.subr.mxu0 0.0
    %538 = vmatpush1.msra.mxu0 %v508
    %539 = vmatprep.subr.mxu0 0.0
    %540 = vmatpush1.msra.mxu0 %v507
    %541 = vmatprep.subr.mxu0 0.0
    %542 = vmatpush1.msra.mxu0 %v506
    %543 = vmatprep.subr.mxu0 0.0
    %544 = vmatpush1.msra.mxu0 %v505
    %545 = vmatprep.subr.mxu0 0.0
    %546 = vmatpush1.msra.mxu0 %v504
    %547 = vmatprep.subr.mxu0 0.0
    %548 = vmatpush1.msra.mxu0 %v503
    %549 = vmatprep.subr.mxu0 0.0
    %550 = vmatpush1.msra.mxu0 %v502
    %551 = vmatprep.subr.mxu0 0.0
    %552 = vmatpush1.msra.mxu0 %v501
    %553 = vmatprep.subr.mxu0 0.0
    %554 = vmatpush1.msra.mxu0 %v500
    %555 = vmatprep.subr.mxu0 0.0
    %556 = vmatpush2.msra.mxu0 0.0
    %557 = vmatprep.subr.mxu0 0.0
    %558 = vmatpush2.msra.mxu0 0.0
    %559 = vmatprep.subr.mxu0 0.0
    %560 = vmatpush2.msra.mxu0 0.0
    %561 = vmatprep.subr.mxu0 0.0
    %562 = vmatpush2.msra.mxu0 0.0
    %563 = vmatprep.subr.mxu0 0.0
    %564 = vmatpush2.msra.mxu0 0.0
    %565 = vmatprep.subr.mxu0 0.0
    %566 = vmatpush2.msra.mxu0 0.0
    %567 = vmatprep.subr.mxu0 0.0
    %568 = vmatpush2.msra.mxu0 0.0
    %569 = vmatprep.subr.mxu0 0.0
    %570 = vmatpush2.msra.mxu0 0.0
    %571 = vmatprep.subr.mxu0 0.0
    %572 = vmatpush2.msra.mxu0 0.0
    %573 = vmatprep.subr.mxu0 0.0
    %574 = vmatpush2.msra.mxu0 0.0
    %575 = vmatprep.subr.mxu0 0.0
    %576 = vmatpush2.msra.mxu0 0.0
    %577 = vmatprep.subr.mxu0 0.0
    %578 = vmatpush2.msra.mxu0 0.0
    %579 = vmatprep.subr.mxu0 0.0
    %580 = vmatpush2.msra.mxu0 0.0
    %581 = vmatprep.subr.mxu0 0.0
    %582 = vmatpush2.msra.mxu0 0.0
    %583 = vmatprep.subr.mxu0 0.0
    %584 = vmatpush2.msra.mxu0 0.0
    %585 = vmatprep.subr.mxu0 0.0
    %586 = vmatpush2.msra.mxu0 0.0
    %587 = vmatprep.mubr.f32.mxu0 0.0
    %588 = vmatmul.mubr.f32.gmra.mxu0 %v499
    %v589 = vpop.f32.mrf.mxu0
    %v590 = vadd.f32 %v521, %v589
    %v591 = vpop.f32.mrf.mxu0
    %592 = vdwg.mxu0
    %593 = vst [vmem:[%s11] sm:$0xff] %v590
    // Predicated region
    $region66: #{_fnn_forward_impl.1} parent=1 // pred_check
      _
    $region67: #{_fnn_forward_impl.1} parent=1 // pred_check_branch
      %595 = sbr.rel (0) target = $region69
    $region68: #{_fnn_forward_impl.1} parent=1 // pred_region
      _
    $region69: #{_fnn_forward_impl.1} parent=1 // pred_fallthru
      _
    // Predicated region
    $region70: #{_fnn_forward_impl.1} parent=1 // pred_check
      _
    $region71: #{_fnn_forward_impl.1} parent=1 // pred_check_branch
      %597 = sbr.rel (0) target = $region73
    $region72: #{_fnn_forward_impl.1} parent=1 // pred_region
      _
    $region73: #{_fnn_forward_impl.1} parent=1 // pred_fallthru
      _
    %598 = vsyncpa [#allocation3], 1
    %599 = vsyncpa [#allocation5], 1
    %600 = vsyncpa [#allocation8], 1

</llo_original>
